<compile_context>
chip_gen: v6e
topology: v6e:2x2x1
jax: 0.10.0
libtpu: 0.0.40
codegen_flags: <defaults>
</compile_context>

<pallas_src>
import jax
import jax.numpy as jnp
from jax.experimental import pallas as pl
from jax.experimental.pallas import tpu as pltpu


def _disc2_kernel(x_ref, w1_ref, b1_ref, w2_ref, b2_ref, w3_ref, b3_ref, o_ref):
    # x_ref : [TM, inc] f32   (cast to bf16 here, not in the wrapper)
    # w1_ref: [inc, 256] bf16    b1_ref: [1, 256] f32
    # w2_ref: [256, 128] bf16    b2_ref: [1, 128] f32
    # w3_ref: [1, 128]  f32      b3_ref: [1, 1]  f32 (SMEM scalar)
    # o_ref : [1, TM]   f32      (lane-dense output row for this batch tile)
    x = x_ref[...].astype(jnp.bfloat16)

    # Layer 1: bf16 MXU matmul, f32 accumulate, f32 activation math.
    h1 = jnp.dot(x, w1_ref[...], preferred_element_type=jnp.float32) + b1_ref[...]
    h1 = jnp.maximum(h1, 0.0)

    # Layer 2: cast activations back to bf16 for the MXU, accumulate in f32.
    h2 = jnp.dot(h1.astype(jnp.bfloat16), w2_ref[...],
                 preferred_element_type=jnp.float32) + b2_ref[...]
    h2 = jnp.maximum(h2, 0.0)

    # Layer 3 (out_features == 1): VPU multiply + XLU lane reduce instead of a
    # lane-sparse N=1 MXU matmul.
    logit = jnp.sum(h2 * w3_ref[...], axis=-1, keepdims=True) + b3_ref[0, 0]
    prob = jax.nn.sigmoid(logit)                       # [TM, 1] f32

    # Sublane->lane relayout (XLU) so the store is one contiguous lane-dense
    # row instead of TM masked single-lane column stores.
    o_ref[...] = prob.reshape(1, -1).astype(o_ref.dtype)


def _round_up(v, m):
    return ((v + m - 1) // m) * m


def _choose_tm(B, tm_max=512):
    """Batch-tile rows.

    Always a multiple of 128 (lane-dense output block + MXU); for B > 128 pick
    at least two tiles so the 'parallel' batch axis can land on both v7x
    TensorCores; round larger tiles to 256 (v6e/v7x MXU height); cap for VMEM.
    """
    tm_max = max(128, (tm_max // 128) * 128)
    if B <= 128:
        return 128
    tm = _round_up(pl.cdiv(B, 2), 128)
    if tm > 256:
        tm = _round_up(tm, 256)
    return min(tm, tm_max)


def discriminator_2_forward(x, params, *, tm_max=512):
    """x: [B, inc] float32. params: dict of w1,b1,w2,b2,w3,b3 (w: [in, out], b: [1, out])."""
    B, inc = x.shape
    TM = _choose_tm(B, tm_max)
    num_tiles = pl.cdiv(B, TM)
    B_pad = num_tiles * TM

    # x stays f32 and unpadded (no extra HBM round-trips in front of a
    # memory-bound kernel); ragged last tile handled by the pipeline.
    x_f = x.astype(jnp.float32)

    # Weights cast once to bf16 for the MXU (tiny, resident across the grid).
    w1_bf = params["w1"].astype(jnp.bfloat16)           # [inc, 256]
    w2_bf = params["w2"].astype(jnp.bfloat16)           # [256, 128]
    b1_f = params["b1"].astype(jnp.float32)             # [1, 256]
    b2_f = params["b2"].astype(jnp.float32)             # [1, 128]
    w3_row = params["w3"].astype(jnp.float32).T         # [1, 128]
    b3_f = params["b3"].astype(jnp.float32).reshape(1, 1)

    flops = 2 * B_pad * (inc * 256 + 256 * 128 + 128)
    bytes_accessed = (x_f.size * 4 + w1_bf.size * 2 + w2_bf.size * 2
                      + (b1_f.size + b2_f.size + w3_row.size + b3_f.size) * 4
                      + B_pad * 4)

    out_row = pl.pallas_call(
        _disc2_kernel,
        out_shape=jax.ShapeDtypeStruct((1, B_pad), jnp.float32),
        grid=(num_tiles,),
        in_specs=[
            pl.BlockSpec((TM, inc), lambda i: (i, 0)),     # x: batch-tiled, double-buffered
            pl.BlockSpec((inc, 256), lambda i: (0, 0)),    # W1: VMEM-resident
            pl.BlockSpec((1, 256), lambda i: (0, 0)),      # b1
            pl.BlockSpec((256, 128), lambda i: (0, 0)),    # W2
            pl.BlockSpec((1, 128), lambda i: (0, 0)),      # b2
            pl.BlockSpec((1, 128), lambda i: (0, 0)),      # W3 (row form)
            pl.BlockSpec(memory_space=pltpu.SMEM),         # b3 scalar lives in SMEM
        ],
        out_specs=pl.BlockSpec((1, TM), lambda i: (0, i)), # lane-dense output row
        compiler_params=pltpu.CompilerParams(
            dimension_semantics=("parallel",),             # megacore on v7x
            vmem_limit_bytes=48 * 1024 * 1024,             # keep 2-deep x pipeline on v5e
        ),
        cost_estimate=pl.CostEstimate(
            flops=flops, transcendentals=B_pad, bytes_accessed=bytes_accessed),
    )(x_f, w1_bf, b1_f, w2_bf, b2_f, w3_row, b3_f)

    # (1, B_pad) lane row  ->  [B, 1] column, padded tail rows dropped.
    return out_row.reshape(B_pad, 1)[:B]


def init_params(key, inc):
    """Deterministic synthetic init (PyTorch-Linear-like uniform ranges)."""
    def linear(key, fan_in, fan_out):
        kw, kb = jax.random.split(key)
        bound = 1.0 / jnp.sqrt(fan_in)
        w = jax.random.uniform(kw, (fan_in, fan_out), jnp.float32, -bound, bound)
        b = jax.random.uniform(kb, (1, fan_out), jnp.float32, -bound, bound)
        return w, b

    k1, k2, k3 = jax.random.split(key, 3)
    w1, b1 = linear(k1, inc, 256)
    w2, b2 = linear(k2, 256, 128)
    w3, b3 = linear(k3, 128, 1)
    return {"w1": w1, "b1": b1, "w2": w2, "b2": b2, "w3": w3, "b3": b3}


def _reference_matched(x, p):
    """Reference with the same bf16-matmul / f32-accumulate recipe as the kernel."""
    xb = x.astype(jnp.bfloat16)
    h1 = jnp.dot(xb, p["w1"].astype(jnp.bfloat16),
                 preferred_element_type=jnp.float32) + p["b1"]
    h1 = jnp.maximum(h1, 0.0)
    h2 = jnp.dot(h1.astype(jnp.bfloat16), p["w2"].astype(jnp.bfloat16),
                 preferred_element_type=jnp.float32) + p["b2"]
    h2 = jnp.maximum(h2, 0.0)
    logit = jnp.sum(h2 * p["w3"].T, axis=-1, keepdims=True) + p["b3"]
    return jax.nn.sigmoid(logit)


def _reference_f32(x, p):
    h1 = jnp.maximum(x @ p["w1"] + p["b1"], 0.0)
    h2 = jnp.maximum(h1 @ p["w2"] + p["b2"], 0.0)
    return jax.nn.sigmoid(h2 @ p["w3"] + p["b3"])


if __name__ == "__main__":
    key = jax.random.PRNGKey(0)
    kx, kp = jax.random.split(key)

    B, INC = 8, 512  # small shapes consistent with the Linear(inc, 256) head
    x = jax.random.normal(kx, (B, INC), jnp.float32)
    params = init_params(kp, INC)

    out = discriminator_2_forward(x, params)
    out = jax.block_until_ready(out)
    assert out.shape == (B, 1)

    # Tight check vs. a precision-matched reference, loose check vs. pure f32.
    ref_m = _reference_matched(x, params)
    ref_f = _reference_f32(x, params)
    assert jnp.allclose(out, ref_m, atol=1e-3, rtol=1e-3)
    assert jnp.allclose(out, ref_f, atol=2e-2, rtol=2e-2)

    print("KERNEL_OK")
</pallas_src>

<mosaic_0001>
module attributes {stable_mosaic.version = 11 : i64} {
  func.func @_disc2_kernel(%arg0: i32, %arg1: memref<128x512xf32, #tpu.memory_space<vmem>>, %arg2: memref<512x256xbf16, #tpu.memory_space<vmem>>, %arg3: memref<1x256xf32, #tpu.memory_space<vmem>>, %arg4: memref<256x128xbf16, #tpu.memory_space<vmem>>, %arg5: memref<1x128xf32, #tpu.memory_space<vmem>>, %arg6: memref<1x128xf32, #tpu.memory_space<vmem>>, %arg7: memref<1x1xf32, #tpu.memory_space<smem>>, %arg8: memref<1x128xf32, #tpu.memory_space<vmem>>) attributes {dimension_semantics = [#tpu.dimension_semantics<parallel>], iteration_bounds = array<i64: 1>, scalar_prefetch = 0 : i64, scratch_operands = 0 : i64, tpu.core_type = #tpu.core_type<tc>, window_params = [{transform_indices = @transform_0, window_bounds = array<i64: 128, 512>}, {pipeline_mode = #tpu.pipeline_mode<synchronous>, transform_indices = @transform_1, window_bounds = array<i64: 512, 256>}, {pipeline_mode = #tpu.pipeline_mode<synchronous>, transform_indices = @transform_2, window_bounds = array<i64: 1, 256>}, {pipeline_mode = #tpu.pipeline_mode<synchronous>, transform_indices = @transform_3, window_bounds = array<i64: 256, 128>}, {pipeline_mode = #tpu.pipeline_mode<synchronous>, transform_indices = @transform_4, window_bounds = array<i64: 1, 128>}, {pipeline_mode = #tpu.pipeline_mode<synchronous>, transform_indices = @transform_5, window_bounds = array<i64: 1, 128>}, {transform_indices = @transform_6, window_bounds = array<i64: 1, 1>}, {transform_indices = @transform_7, window_bounds = array<i64: 1, 128>}]} {
    %c0 = arith.constant 0 : index
    %c0_0 = arith.constant 0 : index
    %0 = vector.load %arg1[%c0, %c0_0] : memref<128x512xf32, #tpu.memory_space<vmem>>, vector<128x512xf32>
    %1 = arith.truncf %0 : vector<128x512xf32> to vector<128x512xbf16>
    %c0_1 = arith.constant 0 : index
    %c0_2 = arith.constant 0 : index
    %2 = vector.load %arg2[%c0_1, %c0_2] : memref<512x256xbf16, #tpu.memory_space<vmem>>, vector<512x256xbf16>
    %cst = arith.constant dense<0.000000e+00> : vector<128x256xf32>
    %3 = tpu.matmul %1, %2, %cst {dimension_numbers = #tpu.dot_dimension_numbers<[1], [0], [0], [1], [0, 0, 1, 1], [], []>} : vector<128x512xbf16>, vector<512x256xbf16>, vector<128x256xf32> -> vector<128x256xf32>
    %c0_3 = arith.constant 0 : index
    %c0_4 = arith.constant 0 : index
    %4 = vector.load %arg3[%c0_3, %c0_4] : memref<1x256xf32, #tpu.memory_space<vmem>>, vector<1x256xf32>
    %5 = vector.broadcast %4 : vector<1x256xf32> to vector<128x256xf32>
    %6 = arith.addf %3, %5 : vector<128x256xf32>
    %cst_5 = arith.constant 0.000000e+00 : f32
    %7 = vector.broadcast %cst_5 : f32 to vector<128x256xf32>
    %8 = arith.maximumf %6, %7 : vector<128x256xf32>
    %9 = arith.truncf %8 : vector<128x256xf32> to vector<128x256xbf16>
    %c0_6 = arith.constant 0 : index
    %c0_7 = arith.constant 0 : index
    %10 = vector.load %arg4[%c0_6, %c0_7] : memref<256x128xbf16, #tpu.memory_space<vmem>>, vector<256x128xbf16>
    %cst_8 = arith.constant dense<0.000000e+00> : vector<128x128xf32>
    %11 = tpu.matmul %9, %10, %cst_8 {dimension_numbers = #tpu.dot_dimension_numbers<[1], [0], [0], [1], [0, 0, 1, 1], [], []>} : vector<128x256xbf16>, vector<256x128xbf16>, vector<128x128xf32> -> vector<128x128xf32>
    %c0_9 = arith.constant 0 : index
    %c0_10 = arith.constant 0 : index
    %12 = vector.load %arg5[%c0_9, %c0_10] : memref<1x128xf32, #tpu.memory_space<vmem>>, vector<1x128xf32>
    %13 = vector.broadcast %12 : vector<1x128xf32> to vector<128x128xf32>
    %14 = arith.addf %11, %13 : vector<128x128xf32>
    %cst_11 = arith.constant 0.000000e+00 : f32
    %15 = vector.broadcast %cst_11 : f32 to vector<128x128xf32>
    %16 = arith.maximumf %14, %15 : vector<128x128xf32>
    %c0_12 = arith.constant 0 : index
    %c0_13 = arith.constant 0 : index
    %17 = vector.load %arg6[%c0_12, %c0_13] : memref<1x128xf32, #tpu.memory_space<vmem>>, vector<1x128xf32>
    %18 = vector.broadcast %17 : vector<1x128xf32> to vector<128x128xf32>
    %19 = arith.mulf %16, %18 : vector<128x128xf32>
    %cst_14 = arith.constant dense<0.000000e+00> : vector<128xf32>
    %20 = vector.multi_reduction <add>, %19, %cst_14 [1] : vector<128x128xf32> to vector<128xf32>
    %21 = vector.shape_cast %20 : vector<128xf32> to vector<128x1xf32>
    %c0_15 = arith.constant 0 : index
    %c0_16 = arith.constant 0 : index
    %22 = memref.load %arg7[%c0_15, %c0_16] : memref<1x1xf32, #tpu.memory_space<smem>>
    %23 = vector.broadcast %22 : f32 to vector<128x1xf32>
    %24 = arith.addf %21, %23 : vector<128x1xf32>
    %25 = arith.negf %24 : vector<128x1xf32>
    %26 = math.exp %25 : vector<128x1xf32>
    %cst_17 = arith.constant 1.000000e+00 : f32
    %27 = vector.broadcast %cst_17 : f32 to vector<128x1xf32>
    %28 = arith.addf %27, %26 : vector<128x1xf32>
    %29 = arith.divf %27, %28 : vector<128x1xf32>
    %30 = vector.shape_cast %29 : vector<128x1xf32> to vector<1x128xf32>
    %c0_18 = arith.constant 0 : index
    %c0_19 = arith.constant 0 : index
    %31 = vector.load %arg8[%c0_18, %c0_19] : memref<1x128xf32, #tpu.memory_space<vmem>>, vector<1x128xf32>
    tpu.vector_store %arg8[%c0_18, %c0_19], %30 {strides = array<i32>} : memref<1x128xf32, #tpu.memory_space<vmem>>, vector<1x128xf32>,
    return
  }
  func.func @transform_0(%arg0: i32) -> (i32, i32) {
    %c0_i32 = arith.constant 0 : i32
    %c0_i32_0 = arith.constant 0 : i32
    return %arg0, %c0_i32 : i32, i32
  }
  func.func @transform_1(%arg0: i32) -> (i32, i32) {
    %c0_i32 = arith.constant 0 : i32
    %c0_i32_0 = arith.constant 0 : i32
    %c0_i32_1 = arith.constant 0 : i32
    return %c0_i32, %c0_i32_0 : i32, i32
  }
  func.func @transform_2(%arg0: i32) -> (i32, i32) {
    %c0_i32 = arith.constant 0 : i32
    %c0_i32_0 = arith.constant 0 : i32
    %c0_i32_1 = arith.constant 0 : i32
    return %c0_i32, %c0_i32_0 : i32, i32
  }
  func.func @transform_3(%arg0: i32) -> (i32, i32) {
    %c0_i32 = arith.constant 0 : i32
    %c0_i32_0 = arith.constant 0 : i32
    %c0_i32_1 = arith.constant 0 : i32
    return %c0_i32, %c0_i32_0 : i32, i32
  }
  func.func @transform_4(%arg0: i32) -> (i32, i32) {
    %c0_i32 = arith.constant 0 : i32
    %c0_i32_0 = arith.constant 0 : i32
    %c0_i32_1 = arith.constant 0 : i32
    return %c0_i32, %c0_i32_0 : i32, i32
  }
  func.func @transform_5(%arg0: i32) -> (i32, i32) {
    %c0_i32 = arith.constant 0 : i32
    %c0_i32_0 = arith.constant 0 : i32
    %c0_i32_1 = arith.constant 0 : i32
    return %c0_i32, %c0_i32_0 : i32, i32
  }
  func.func @transform_6(%arg0: i32) -> (i32, i32) {
    %c0_i32 = arith.constant 0 : i32
    %c0_i32_0 = arith.constant 0 : i32
    %c0_i32_1 = arith.constant 0 : i32
    return %c0_i32, %c0_i32_0 : i32, i32
  }
  func.func @transform_7(%arg0: i32) -> (i32, i32) {
    %c0_i32 = arith.constant 0 : i32
    %c0_i32_0 = arith.constant 0 : i32
    return %c0_i32, %arg0 : i32, i32
  }
}

</mosaic_0001>

<llo_original>
// kernel: tpu_custom_call.1
$region0: #{tpu_custom_call.1}
  #allocation0 [shape = 'u32[]', space=smem, size = 0x4, offset = 0x4, fixed_abs, tag = 'smem constant byte address 0x4 - core index']
  #allocation1 [shape = 'u32[144,128]{1,0:T(1,128)}', space=vmem, size = 0x12000, scoped, tag = 'internal scratch']
  #allocation2 [shape = 'f32[1,1]{1,0:T(1,128)S(6)}', space=smem, size = 0x200, scoped, tag = 'scoped memory for tpu_custom_call.1']
  %s0 = inlined_call_operand.hbm [shape: f32[8,512], index: 0, kind: input, shape index: {}]
  %s1 = inlined_call_operand.hbm [shape: bf16[512,256], index: 1, kind: input, shape index: {}]
  %s2 = inlined_call_operand.vmem [shape: f32[1,256], index: 2, kind: input, shape index: {}]
  %s3 = inlined_call_operand.hbm [shape: bf16[256,128], index: 3, kind: input, shape index: {}]
  %s4 = inlined_call_operand.vmem [shape: f32[1,128], index: 4, kind: input, shape index: {}]
  %s5 = inlined_call_operand.vmem [shape: f32[1,128], index: 5, kind: input, shape index: {}]
  %s6 = inlined_call_operand.<no memory space> [shape: f32[1,1], index: 6, kind: input, shape index: {}]
  %s7 = inlined_call_operand.hbm [shape: f32[1,128], index: 7, kind: output, shape index: {}]
  %s8 = sld [smem:[#allocation0]]
  $region50: #{tpu_custom_call.1} parent=0
    _
  %s10 = ssub.s32 1, %s8
  %s11 = scalar_select 0, %s10, %s8
  %12 = sst [smem:[#allocation2]] %s6
  $region1: #{tpu_custom_call.1} parent=0
    #allocation3 [shape = 'u8[262144]{0}', space=vmem, size = 0x40000, scoped, tag = 'input window, operand 0, single buffered']
    #allocation4 [shape = 's32[1]{0}', space=sflag, size = 0x4, scoped, tag = 'scoped memory for tpu_custom_call.1']
    #allocation5 [shape = 's32[1]{0}', space=sflag, size = 0x4, scoped, tag = 'scoped memory for tpu_custom_call.1']
    #allocation6 [shape = 'u8[262144]{0}', space=vmem, size = 0x40000, scoped, tag = 'input window, operand 1, single buffered']
    #allocation7 [shape = 's32[1]{0}', space=sflag, size = 0x4, scoped, tag = 'scoped memory for tpu_custom_call.1']
    #allocation8 [shape = 'u8[65536]{0}', space=vmem, size = 0x10000, scoped, tag = 'input window, operand 3, single buffered']
    #allocation9 [shape = 'u8[512]{0}', space=vmem, size = 0x400, scoped, tag = 'output window, operand 0, single buffered']
    %13 = vsyncpa [#allocation4], 0
    %14 = vsyncpa [#allocation7], 0
    %15 = vsyncpa [#allocation5], 0
    // Predicated region
    $region2: #{tpu_custom_call.1} parent=1 // pred_check
      _
    $region3: #{tpu_custom_call.1} parent=1 // pred_check_branch
      %17 = sbr.rel (0) target = $region5
    $region4: #{tpu_custom_call.1} parent=1 // pred_region
      %s19 = ssub.s32 8192, 512
      %20 = vsyncadd [#allocation4], %s19
      %s21 = sshll.u32 [#allocation3], 4
      %s22 = int_to_ptr.vmem [resolvable:$true] %s21
      %27 = dma.hbm_to_vmem [thread:$0]  %s0, 512, %s22, [#allocation4], 512, 512, 32
    $region5: #{tpu_custom_call.1} parent=1 // pred_fallthru
      _
    // Predicated region
    $region6: #{tpu_custom_call.1} parent=1 // pred_check
      _
    $region7: #{tpu_custom_call.1} parent=1 // pred_check_branch
      %29 = sbr.rel (0) target = $region9
    $region8: #{tpu_custom_call.1} parent=1 // pred_region
      %s31 = ssub.s32 8192, 8192
      %32 = vsyncadd [#allocation7], %s31
      %s33 = sshll.u32 [#allocation6], 4
      %s34 = int_to_ptr.vmem [resolvable:$true] %s33
      %39 = dma.hbm_to_vmem [thread:$0]  %s1, 8192, %s34, [#allocation7], 128, 128, 8
    $region9: #{tpu_custom_call.1} parent=1 // pred_fallthru
      _
    // Predicated region
    $region10: #{tpu_custom_call.1} parent=1 // pred_check
      _
    $region11: #{tpu_custom_call.1} parent=1 // pred_check_branch
      %41 = sbr.rel (0) target = $region13
    $region12: #{tpu_custom_call.1} parent=1 // pred_region
      _
    $region13: #{tpu_custom_call.1} parent=1 // pred_fallthru
      _
    // Predicated region
    $region14: #{tpu_custom_call.1} parent=1 // pred_check
      _
    $region15: #{tpu_custom_call.1} parent=1 // pred_check_branch
      %43 = sbr.rel (0) target = $region17
    $region16: #{tpu_custom_call.1} parent=1 // pred_region
      %s45 = ssub.s32 2048, 2048
      %46 = vsyncadd [#allocation7], %s45
      %s47 = sshll.u32 [#allocation8], 4
      %s48 = int_to_ptr.vmem [resolvable:$true] %s47
      %53 = dma.hbm_to_vmem [thread:$0]  %s3, 2048, %s48, [#allocation7], 64, 64, 4
    $region17: #{tpu_custom_call.1} parent=1 // pred_fallthru
      _
    // Predicated region
    $region18: #{tpu_custom_call.1} parent=1 // pred_check
      _
    $region19: #{tpu_custom_call.1} parent=1 // pred_check_branch
      %55 = sbr.rel (0) target = $region21
    $region20: #{tpu_custom_call.1} parent=1 // pred_region
      _
    $region21: #{tpu_custom_call.1} parent=1 // pred_fallthru
      _
    // Predicated region
    $region22: #{tpu_custom_call.1} parent=1 // pred_check
      _
    $region23: #{tpu_custom_call.1} parent=1 // pred_check_branch
      %57 = sbr.rel (0) target = $region25
    $region24: #{tpu_custom_call.1} parent=1 // pred_region
      _
    $region25: #{tpu_custom_call.1} parent=1 // pred_fallthru
      _
    // Predicated region
    $region26: #{tpu_custom_call.1} parent=1 // pred_check
      _
    $region27: #{tpu_custom_call.1} parent=1 // pred_check_branch
      %59 = sbr.rel (0) target = $region29
    $region28: #{tpu_custom_call.1} parent=1 // pred_region
      _
    $region29: #{tpu_custom_call.1} parent=1 // pred_fallthru
      _
    // Predicated region
    $region30: #{tpu_custom_call.1} parent=1 // pred_check
      _
    $region31: #{tpu_custom_call.1} parent=1 // pred_check_branch
      %61 = sbr.rel (0) target = $region33
    $region32: #{tpu_custom_call.1} parent=1 // pred_region
      %62 = dma.done [#allocation4], 8192
    $region33: #{tpu_custom_call.1} parent=1 // pred_fallthru
      _
    // Predicated region
    $region34: #{tpu_custom_call.1} parent=1 // pred_check
      _
    $region35: #{tpu_custom_call.1} parent=1 // pred_check_branch
      %64 = sbr.rel (0) target = $region37
    $region36: #{tpu_custom_call.1} parent=1 // pred_region
      %65 = dma.done [#allocation7], 8192
    $region37: #{tpu_custom_call.1} parent=1 // pred_fallthru
      _
    // Predicated region
    $region38: #{tpu_custom_call.1} parent=1 // pred_check
      _
    $region39: #{tpu_custom_call.1} parent=1 // pred_check_branch
      %67 = sbr.rel (0) target = $region41
    $region40: #{tpu_custom_call.1} parent=1 // pred_region
      %68 = dma.done [#allocation7], 2048
    $region41: #{tpu_custom_call.1} parent=1 // pred_fallthru
      _
    %v70 = vld [vmem:[#allocation3] sm:$0xff]
    %v71 = vld [vmem:[#allocation3 + $0x8] sm:$0xff]
    %v72 = vld [vmem:[#allocation3 + $0x10] sm:$0xff]
    %v73 = vld [vmem:[#allocation3 + $0x18] sm:$0xff]
    %v74 = vld [vmem:[#allocation3 + $0x20] sm:$0xff]
    %v75 = vld [vmem:[#allocation3 + $0x28] sm:$0xff]
    %v76 = vld [vmem:[#allocation3 + $0x30] sm:$0xff]
    %v77 = vld [vmem:[#allocation3 + $0x38] sm:$0xff]
    %v78 = vld [vmem:[#allocation3 + $0x40] sm:$0xff]
    %v79 = vld [vmem:[#allocation3 + $0x48] sm:$0xff]
    %v80 = vld [vmem:[#allocation3 + $0x50] sm:$0xff]
    %v81 = vld [vmem:[#allocation3 + $0x58] sm:$0xff]
    %v82 = vld [vmem:[#allocation3 + $0x60] sm:$0xff]
    %v83 = vld [vmem:[#allocation3 + $0x68] sm:$0xff]
    %v84 = vld [vmem:[#allocation3 + $0x70] sm:$0xff]
    %v85 = vld [vmem:[#allocation3 + $0x78] sm:$0xff]
    %v86 = vld [vmem:[#allocation3 + $0x80] sm:$0xff]
    %v87 = vld [vmem:[#allocation3 + $0x88] sm:$0xff]
    %v88 = vld [vmem:[#allocation3 + $0x90] sm:$0xff]
    %v89 = vld [vmem:[#allocation3 + $0x98] sm:$0xff]
    %v90 = vld [vmem:[#allocation3 + $0xa0] sm:$0xff]
    %v91 = vld [vmem:[#allocation3 + $0xa8] sm:$0xff]
    %v92 = vld [vmem:[#allocation3 + $0xb0] sm:$0xff]
    %v93 = vld [vmem:[#allocation3 + $0xb8] sm:$0xff]
    %v94 = vld [vmem:[#allocation3 + $0xc0] sm:$0xff]
    %v95 = vld [vmem:[#allocation3 + $0xc8] sm:$0xff]
    %v96 = vld [vmem:[#allocation3 + $0xd0] sm:$0xff]
    %v97 = vld [vmem:[#allocation3 + $0xd8] sm:$0xff]
    %v98 = vld [vmem:[#allocation3 + $0xe0] sm:$0xff]
    %v99 = vld [vmem:[#allocation3 + $0xe8] sm:$0xff]
    %v100 = vld [vmem:[#allocation3 + $0xf0] sm:$0xff]
    %v101 = vld [vmem:[#allocation3 + $0xf8] sm:$0xff]
    %v102 = vld [vmem:[#allocation3 + $0x100] sm:$0xff]
    %v103 = vld [vmem:[#allocation3 + $0x108] sm:$0xff]
    %v104 = vld [vmem:[#allocation3 + $0x110] sm:$0xff]
    %v105 = vld [vmem:[#allocation3 + $0x118] sm:$0xff]
    %v106 = vld [vmem:[#allocation3 + $0x120] sm:$0xff]
    %v107 = vld [vmem:[#allocation3 + $0x128] sm:$0xff]
    %v108 = vld [vmem:[#allocation3 + $0x130] sm:$0xff]
    %v109 = vld [vmem:[#allocation3 + $0x138] sm:$0xff]
    %v110 = vld [vmem:[#allocation3 + $0x140] sm:$0xff]
    %v111 = vld [vmem:[#allocation3 + $0x148] sm:$0xff]
    %v112 = vld [vmem:[#allocation3 + $0x150] sm:$0xff]
    %v113 = vld [vmem:[#allocation3 + $0x158] sm:$0xff]
    %v114 = vld [vmem:[#allocation3 + $0x160] sm:$0xff]
    %v115 = vld [vmem:[#allocation3 + $0x168] sm:$0xff]
    %v116 = vld [vmem:[#allocation3 + $0x170] sm:$0xff]
    %v117 = vld [vmem:[#allocation3 + $0x178] sm:$0xff]
    %v118 = vld [vmem:[#allocation3 + $0x180] sm:$0xff]
    %v119 = vld [vmem:[#allocation3 + $0x188] sm:$0xff]
    %v120 = vld [vmem:[#allocation3 + $0x190] sm:$0xff]
    %v121 = vld [vmem:[#allocation3 + $0x198] sm:$0xff]
    %v122 = vld [vmem:[#allocation3 + $0x1a0] sm:$0xff]
    %v123 = vld [vmem:[#allocation3 + $0x1a8] sm:$0xff]
    %v124 = vld [vmem:[#allocation3 + $0x1b0] sm:$0xff]
    %v125 = vld [vmem:[#allocation3 + $0x1b8] sm:$0xff]
    %v126 = vld [vmem:[#allocation3 + $0x1c0] sm:$0xff]
    %v127 = vld [vmem:[#allocation3 + $0x1c8] sm:$0xff]
    %v128 = vld [vmem:[#allocation3 + $0x1d0] sm:$0xff]
    %v129 = vld [vmem:[#allocation3 + $0x1d8] sm:$0xff]
    %v130 = vld [vmem:[#allocation3 + $0x1e0] sm:$0xff]
    %v131 = vld [vmem:[#allocation3 + $0x1e8] sm:$0xff]
    %v132 = vld [vmem:[#allocation3 + $0x1f0] sm:$0xff]
    %v133 = vld [vmem:[#allocation3 + $0x1f8] sm:$0xff]
    %v134 = vpack.c.bf16 %v74, %v70
    %v135 = vpack.c.bf16 %v75, %v71
    %v136 = vpack.c.bf16 %v76, %v72
    %v137 = vpack.c.bf16 %v77, %v73
    %v138 = vpack.c.bf16 %v82, %v78
    %v139 = vpack.c.bf16 %v83, %v79
    %v140 = vpack.c.bf16 %v84, %v80
    %v141 = vpack.c.bf16 %v85, %v81
    %v142 = vpack.c.bf16 %v90, %v86
    %v143 = vpack.c.bf16 %v91, %v87
    %v144 = vpack.c.bf16 %v92, %v88
    %v145 = vpack.c.bf16 %v93, %v89
    %v146 = vpack.c.bf16 %v98, %v94
    %v147 = vpack.c.bf16 %v99, %v95
    %v148 = vpack.c.bf16 %v100, %v96
    %v149 = vpack.c.bf16 %v101, %v97
    %v150 = vpack.c.bf16 %v106, %v102
    %v151 = vpack.c.bf16 %v107, %v103
    %v152 = vpack.c.bf16 %v108, %v104
    %v153 = vpack.c.bf16 %v109, %v105
    %v154 = vpack.c.bf16 %v114, %v110
    %v155 = vpack.c.bf16 %v115, %v111
    %v156 = vpack.c.bf16 %v116, %v112
    %v157 = vpack.c.bf16 %v117, %v113
    %v158 = vpack.c.bf16 %v122, %v118
    %v159 = vpack.c.bf16 %v123, %v119
    %v160 = vpack.c.bf16 %v124, %v120
    %v161 = vpack.c.bf16 %v125, %v121
    %v162 = vpack.c.bf16 %v130, %v126
    %v163 = vpack.c.bf16 %v131, %v127
    %v164 = vpack.c.bf16 %v132, %v128
    %v165 = vpack.c.bf16 %v133, %v129
    %v166 = vld [vmem:[#allocation6] sm:$0xff]
    %v167 = vld [vmem:[#allocation6 + $0x8] sm:$0xff]
    %v168 = vld [vmem:[#allocation6 + $0x10] sm:$0xff]
    %v169 = vld [vmem:[#allocation6 + $0x18] sm:$0xff]
    %v170 = vld [vmem:[#allocation6 + $0x20] sm:$0xff]
    %v171 = vld [vmem:[#allocation6 + $0x28] sm:$0xff]
    %v172 = vld [vmem:[#allocation6 + $0x30] sm:$0xff]
    %v173 = vld [vmem:[#allocation6 + $0x38] sm:$0xff]
    %v174 = vld [vmem:[#allocation6 + $0x40] sm:$0xff]
    %v175 = vld [vmem:[#allocation6 + $0x48] sm:$0xff]
    %v176 = vld [vmem:[#allocation6 + $0x50] sm:$0xff]
    %v177 = vld [vmem:[#allocation6 + $0x58] sm:$0xff]
    %v178 = vld [vmem:[#allocation6 + $0x60] sm:$0xff]
    %v179 = vld [vmem:[#allocation6 + $0x68] sm:$0xff]
    %v180 = vld [vmem:[#allocation6 + $0x70] sm:$0xff]
    %v181 = vld [vmem:[#allocation6 + $0x78] sm:$0xff]
    %v182 = vld [vmem:[#allocation6 + $0x80] sm:$0xff]
    %v183 = vld [vmem:[#allocation6 + $0x88] sm:$0xff]
    %v184 = vld [vmem:[#allocation6 + $0x90] sm:$0xff]
    %v185 = vld [vmem:[#allocation6 + $0x98] sm:$0xff]
    %v186 = vld [vmem:[#allocation6 + $0xa0] sm:$0xff]
    %v187 = vld [vmem:[#allocation6 + $0xa8] sm:$0xff]
    %v188 = vld [vmem:[#allocation6 + $0xb0] sm:$0xff]
    %v189 = vld [vmem:[#allocation6 + $0xb8] sm:$0xff]
    %v190 = vld [vmem:[#allocation6 + $0xc0] sm:$0xff]
    %v191 = vld [vmem:[#allocation6 + $0xc8] sm:$0xff]
    %v192 = vld [vmem:[#allocation6 + $0xd0] sm:$0xff]
    %v193 = vld [vmem:[#allocation6 + $0xd8] sm:$0xff]
    %v194 = vld [vmem:[#allocation6 + $0xe0] sm:$0xff]
    %v195 = vld [vmem:[#allocation6 + $0xe8] sm:$0xff]
    %v196 = vld [vmem:[#allocation6 + $0xf0] sm:$0xff]
    %v197 = vld [vmem:[#allocation6 + $0xf8] sm:$0xff]
    %v198 = vld [vmem:[#allocation6 + $0x100] sm:$0xff]
    %v199 = vld [vmem:[#allocation6 + $0x108] sm:$0xff]
    %v200 = vld [vmem:[#allocation6 + $0x110] sm:$0xff]
    %v201 = vld [vmem:[#allocation6 + $0x118] sm:$0xff]
    %v202 = vld [vmem:[#allocation6 + $0x120] sm:$0xff]
    %v203 = vld [vmem:[#allocation6 + $0x128] sm:$0xff]
    %v204 = vld [vmem:[#allocation6 + $0x130] sm:$0xff]
    %v205 = vld [vmem:[#allocation6 + $0x138] sm:$0xff]
    %v206 = vld [vmem:[#allocation6 + $0x140] sm:$0xff]
    %v207 = vld [vmem:[#allocation6 + $0x148] sm:$0xff]
    %v208 = vld [vmem:[#allocation6 + $0x150] sm:$0xff]
    %v209 = vld [vmem:[#allocation6 + $0x158] sm:$0xff]
    %v210 = vld [vmem:[#allocation6 + $0x160] sm:$0xff]
    %v211 = vld [vmem:[#allocation6 + $0x168] sm:$0xff]
    %v212 = vld [vmem:[#allocation6 + $0x170] sm:$0xff]
    %v213 = vld [vmem:[#allocation6 + $0x178] sm:$0xff]
    %v214 = vld [vmem:[#allocation6 + $0x180] sm:$0xff]
    %v215 = vld [vmem:[#allocation6 + $0x188] sm:$0xff]
    %v216 = vld [vmem:[#allocation6 + $0x190] sm:$0xff]
    %v217 = vld [vmem:[#allocation6 + $0x198] sm:$0xff]
    %v218 = vld [vmem:[#allocation6 + $0x1a0] sm:$0xff]
    %v219 = vld [vmem:[#allocation6 + $0x1a8] sm:$0xff]
    %v220 = vld [vmem:[#allocation6 + $0x1b0] sm:$0xff]
    %v221 = vld [vmem:[#allocation6 + $0x1b8] sm:$0xff]
    %v222 = vld [vmem:[#allocation6 + $0x1c0] sm:$0xff]
    %v223 = vld [vmem:[#allocation6 + $0x1c8] sm:$0xff]
    %v224 = vld [vmem:[#allocation6 + $0x1d0] sm:$0xff]
    %v225 = vld [vmem:[#allocation6 + $0x1d8] sm:$0xff]
    %v226 = vld [vmem:[#allocation6 + $0x1e0] sm:$0xff]
    %v227 = vld [vmem:[#allocation6 + $0x1e8] sm:$0xff]
    %v228 = vld [vmem:[#allocation6 + $0x1f0] sm:$0xff]
    %v229 = vld [vmem:[#allocation6 + $0x1f8] sm:$0xff]
    %v230 = vld [vmem:[%s2] sm:$0x3]
    %v232 = vlaneseq
    %v233 = vshrl.u32 %v232, 7
    %v234 = vsub.s32 0, %v233
    %v235 = vrot.slane %v230, %v234
    %v236 = vlaneseq
    %v237 = vshrl.u32 %v236, 7
    %v238 = vsub.s32 1, %v237
    %v239 = vrot.slane %v230, %v238
    %v306 = vunpack.c.l.b16 %v166
    %v307 = vunpack.c.h.b16 %v166
    %v308 = vunpack.c.l.b16 %v167
    %v309 = vunpack.c.h.b16 %v167
    %v310 = vunpack.c.l.b16 %v168
    %v311 = vunpack.c.h.b16 %v168
    %v312 = vunpack.c.l.b16 %v169
    %v313 = vunpack.c.h.b16 %v169
    %v314 = vunpack.c.l.b16 %v170
    %v315 = vunpack.c.h.b16 %v170
    %v316 = vunpack.c.l.b16 %v171
    %v317 = vunpack.c.h.b16 %v171
    %v318 = vunpack.c.l.b16 %v172
    %v319 = vunpack.c.h.b16 %v172
    %v320 = vunpack.c.l.b16 %v173
    %v321 = vunpack.c.h.b16 %v173
    %v322 = vunpack.c.l.b16 %v174
    %v323 = vunpack.c.h.b16 %v174
    %v324 = vunpack.c.l.b16 %v175
    %v325 = vunpack.c.h.b16 %v175
    %v326 = vunpack.c.l.b16 %v176
    %v327 = vunpack.c.h.b16 %v176
    %v328 = vunpack.c.l.b16 %v177
    %v329 = vunpack.c.h.b16 %v177
    %v330 = vunpack.c.l.b16 %v178
    %v331 = vunpack.c.h.b16 %v178
    %v332 = vunpack.c.l.b16 %v179
    %v333 = vunpack.c.h.b16 %v179
    %v334 = vunpack.c.l.b16 %v180
    %v335 = vunpack.c.h.b16 %v180
    %v336 = vunpack.c.l.b16 %v181
    %v337 = vunpack.c.h.b16 %v181
    %v338 = vunpack.c.l.b16 %v182
    %v339 = vunpack.c.h.b16 %v182
    %v340 = vunpack.c.l.b16 %v183
    %v341 = vunpack.c.h.b16 %v183
    %v342 = vunpack.c.l.b16 %v184
    %v343 = vunpack.c.h.b16 %v184
    %v344 = vunpack.c.l.b16 %v185
    %v345 = vunpack.c.h.b16 %v185
    %v346 = vunpack.c.l.b16 %v186
    %v347 = vunpack.c.h.b16 %v186
    %v348 = vunpack.c.l.b16 %v187
    %v349 = vunpack.c.h.b16 %v187
    %v350 = vunpack.c.l.b16 %v188
    %v351 = vunpack.c.h.b16 %v188
    %v352 = vunpack.c.l.b16 %v189
    %v353 = vunpack.c.h.b16 %v189
    %v354 = vunpack.c.l.b16 %v190
    %v355 = vunpack.c.h.b16 %v190
    %v356 = vunpack.c.l.b16 %v191
    %v357 = vunpack.c.h.b16 %v191
    %v358 = vunpack.c.l.b16 %v192
    %v359 = vunpack.c.h.b16 %v192
    %v360 = vunpack.c.l.b16 %v193
    %v361 = vunpack.c.h.b16 %v193
    %v362 = vunpack.c.l.b16 %v194
    %v363 = vunpack.c.h.b16 %v194
    %v364 = vunpack.c.l.b16 %v195
    %v365 = vunpack.c.h.b16 %v195
    %v366 = vunpack.c.l.b16 %v196
    %v367 = vunpack.c.h.b16 %v196
    %v368 = vunpack.c.l.b16 %v197
    %v369 = vunpack.c.h.b16 %v197
    %v370 = vunpack.c.l.b16 %v198
    %v371 = vunpack.c.h.b16 %v198
    %v372 = vunpack.c.l.b16 %v199
    %v373 = vunpack.c.h.b16 %v199
    %v374 = vunpack.c.l.b16 %v200
    %v375 = vunpack.c.h.b16 %v200
    %v376 = vunpack.c.l.b16 %v201
    %v377 = vunpack.c.h.b16 %v201
    %v378 = vunpack.c.l.b16 %v202
    %v379 = vunpack.c.h.b16 %v202
    %v380 = vunpack.c.l.b16 %v203
    %v381 = vunpack.c.h.b16 %v203
    %v382 = vunpack.c.l.b16 %v204
    %v383 = vunpack.c.h.b16 %v204
    %v384 = vunpack.c.l.b16 %v205
    %v385 = vunpack.c.h.b16 %v205
    %v386 = vunpack.c.l.b16 %v206
    %v387 = vunpack.c.h.b16 %v206
    %v388 = vunpack.c.l.b16 %v207
    %v389 = vunpack.c.h.b16 %v207
    %v390 = vunpack.c.l.b16 %v208
    %v391 = vunpack.c.h.b16 %v208
    %v392 = vunpack.c.l.b16 %v209
    %v393 = vunpack.c.h.b16 %v209
    %v394 = vunpack.c.l.b16 %v210
    %v395 = vunpack.c.h.b16 %v210
    %v396 = vunpack.c.l.b16 %v211
    %v397 = vunpack.c.h.b16 %v211
    %v398 = vunpack.c.l.b16 %v212
    %v399 = vunpack.c.h.b16 %v212
    %v400 = vunpack.c.l.b16 %v213
    %v401 = vunpack.c.h.b16 %v213
    %v402 = vunpack.c.l.b16 %v214
    %v403 = vunpack.c.h.b16 %v214
    %v404 = vunpack.c.l.b16 %v215
    %v405 = vunpack.c.h.b16 %v215
    %v406 = vunpack.c.l.b16 %v216
    %v407 = vunpack.c.h.b16 %v216
    %v408 = vunpack.c.l.b16 %v217
    %v409 = vunpack.c.h.b16 %v217
    %v410 = vunpack.c.l.b16 %v218
    %v411 = vunpack.c.h.b16 %v218
    %v412 = vunpack.c.l.b16 %v219
    %v413 = vunpack.c.h.b16 %v219
    %v414 = vunpack.c.l.b16 %v220
    %v415 = vunpack.c.h.b16 %v220
    %v416 = vunpack.c.l.b16 %v221
    %v417 = vunpack.c.h.b16 %v221
    %v418 = vunpack.c.l.b16 %v222
    %v419 = vunpack.c.h.b16 %v222
    %v420 = vunpack.c.l.b16 %v223
    %v421 = vunpack.c.h.b16 %v223
    %v422 = vunpack.c.l.b16 %v224
    %v423 = vunpack.c.h.b16 %v224
    %v424 = vunpack.c.l.b16 %v225
    %v425 = vunpack.c.h.b16 %v225
    %v426 = vunpack.c.l.b16 %v226
    %v427 = vunpack.c.h.b16 %v226
    %v428 = vunpack.c.l.b16 %v227
    %v429 = vunpack.c.h.b16 %v227
    %v430 = vunpack.c.l.b16 %v228
    %v431 = vunpack.c.h.b16 %v228
    %v432 = vunpack.c.l.b16 %v229
    %v433 = vunpack.c.h.b16 %v229
    %v434 = vpack.c.b16 %v308, %v306
    %v435 = vpack.c.b16 %v309, %v307
    %v436 = vpack.c.b16 %v312, %v310
    %v437 = vpack.c.b16 %v313, %v311
    %v438 = vpack.c.b16 %v316, %v314
    %v439 = vpack.c.b16 %v317, %v315
    %v440 = vpack.c.b16 %v320, %v318
    %v441 = vpack.c.b16 %v321, %v319
    %v442 = vpack.c.b16 %v324, %v322
    %v443 = vpack.c.b16 %v325, %v323
    %v444 = vpack.c.b16 %v328, %v326
    %v445 = vpack.c.b16 %v329, %v327
    %v446 = vpack.c.b16 %v332, %v330
    %v447 = vpack.c.b16 %v333, %v331
    %v448 = vpack.c.b16 %v336, %v334
    %v449 = vpack.c.b16 %v337, %v335
    %v450 = vpack.c.b16 %v340, %v338
    %v451 = vpack.c.b16 %v341, %v339
    %v452 = vpack.c.b16 %v344, %v342
    %v453 = vpack.c.b16 %v345, %v343
    %v454 = vpack.c.b16 %v348, %v346
    %v455 = vpack.c.b16 %v349, %v347
    %v456 = vpack.c.b16 %v352, %v350
    %v457 = vpack.c.b16 %v353, %v351
    %v458 = vpack.c.b16 %v356, %v354
    %v459 = vpack.c.b16 %v357, %v355
    %v460 = vpack.c.b16 %v360, %v358
    %v461 = vpack.c.b16 %v361, %v359
    %v462 = vpack.c.b16 %v364, %v362
    %v463 = vpack.c.b16 %v365, %v363
    %v464 = vpack.c.b16 %v368, %v366
    %v465 = vpack.c.b16 %v369, %v367
    %v466 = vpack.c.b16 %v372, %v370
    %v467 = vpack.c.b16 %v373, %v371
    %v468 = vpack.c.b16 %v376, %v374
    %v469 = vpack.c.b16 %v377, %v375
    %v470 = vpack.c.b16 %v380, %v378
    %v471 = vpack.c.b16 %v381, %v379
    %v472 = vpack.c.b16 %v384, %v382
    %v473 = vpack.c.b16 %v385, %v383
    %v474 = vpack.c.b16 %v388, %v386
    %v475 = vpack.c.b16 %v389, %v387
    %v476 = vpack.c.b16 %v392, %v390
    %v477 = vpack.c.b16 %v393, %v391
    %v478 = vpack.c.b16 %v396, %v394
    %v479 = vpack.c.b16 %v397, %v395
    %v480 = vpack.c.b16 %v400, %v398
    %v481 = vpack.c.b16 %v401, %v399
    %v482 = vpack.c.b16 %v404, %v402
    %v483 = vpack.c.b16 %v405, %v403
    %v484 = vpack.c.b16 %v408, %v406
    %v485 = vpack.c.b16 %v409, %v407
    %v486 = vpack.c.b16 %v412, %v410
    %v487 = vpack.c.b16 %v413, %v411
    %v488 = vpack.c.b16 %v416, %v414
    %v489 = vpack.c.b16 %v417, %v415
    %v490 = vpack.c.b16 %v420, %v418
    %v491 = vpack.c.b16 %v421, %v419
    %v492 = vpack.c.b16 %v424, %v422
    %v493 = vpack.c.b16 %v425, %v423
    %v494 = vpack.c.b16 %v428, %v426
    %v495 = vpack.c.b16 %v429, %v427
    %v496 = vpack.c.b16 %v432, %v430
    %v497 = vpack.c.b16 %v433, %v431
    %562 = vmatprep.subr.bf16.mxu0 %v449
    %563 = vmatpush1.bf16.msra.mxu0 %v448
    %564 = vmatprep.subr.bf16.mxu0 %v447
    %565 = vmatpush1.bf16.msra.mxu0 %v446
    %566 = vmatprep.subr.bf16.mxu0 %v445
    %567 = vmatpush1.bf16.msra.mxu0 %v444
    %568 = vmatprep.subr.bf16.mxu0 %v443
    %569 = vmatpush1.bf16.msra.mxu0 %v442
    %570 = vmatprep.subr.bf16.mxu0 %v441
    %571 = vmatpush1.bf16.msra.mxu0 %v440
    %572 = vmatprep.subr.bf16.mxu0 %v439
    %573 = vmatpush1.bf16.msra.mxu0 %v438
    %574 = vmatprep.subr.bf16.mxu0 %v437
    %575 = vmatpush1.bf16.msra.mxu0 %v436
    %576 = vmatprep.subr.bf16.mxu0 %v435
    %577 = vmatpush1.bf16.msra.mxu0 %v434
    %578 = vmatprep.subr.bf16.mxu0 %v465
    %579 = vmatpush2.bf16.msra.mxu0 %v464
    %580 = vmatprep.subr.bf16.mxu0 %v463
    %581 = vmatpush2.bf16.msra.mxu0 %v462
    %582 = vmatprep.subr.bf16.mxu0 %v461
    %583 = vmatpush2.bf16.msra.mxu0 %v460
    %584 = vmatprep.subr.bf16.mxu0 %v459
    %585 = vmatpush2.bf16.msra.mxu0 %v458
    %586 = vmatprep.subr.bf16.mxu0 %v457
    %587 = vmatpush2.bf16.msra.mxu0 %v456
    %588 = vmatprep.subr.bf16.mxu0 %v455
    %589 = vmatpush2.bf16.msra.mxu0 %v454
    %590 = vmatprep.subr.bf16.mxu0 %v453
    %591 = vmatpush2.bf16.msra.mxu0 %v452
    %592 = vmatprep.subr.bf16.mxu0 %v451
    %593 = vmatpush2.bf16.msra.mxu0 %v450
    %594 = vmatprep.mubr.bf16.mxu0 %v135
    %595 = vmatmul.mubr.bf16.gmra.mxu0 %v134
    %v596 = vpop.f32.mrf.mxu0
    %v597 = vadd.f32 %v235, %v596
    %v598 = vpop.f32.mrf.mxu0
    %v599 = vadd.f32 %v239, %v598
    %v600 = vpop.f32.mrf.mxu0
    %v601 = vadd.f32 %v235, %v600
    %v602 = vpop.f32.mrf.mxu0
    %v603 = vadd.f32 %v239, %v602
    %604 = vmatprep.mubr.bf16.mxu0 %v139
    %605 = vmatmul.mubr.bf16.gmra.mxu0 %v138
    %v606 = vpop.f32.mrf.mxu0
    %v607 = vadd.f32 %v235, %v606
    %v608 = vpop.f32.mrf.mxu0
    %v609 = vadd.f32 %v239, %v608
    %v610 = vpop.f32.mrf.mxu0
    %v611 = vadd.f32 %v235, %v610
    %v612 = vpop.f32.mrf.mxu0
    %v613 = vadd.f32 %v239, %v612
    %614 = vmatprep.mubr.bf16.mxu0 %v143
    %615 = vmatmul.mubr.bf16.gmra.mxu0 %v142
    %v616 = vpop.f32.mrf.mxu0
    %v617 = vadd.f32 %v235, %v616
    %v618 = vpop.f32.mrf.mxu0
    %v619 = vadd.f32 %v239, %v618
    %v620 = vpop.f32.mrf.mxu0
    %v621 = vadd.f32 %v235, %v620
    %v622 = vpop.f32.mrf.mxu0
    %v623 = vadd.f32 %v239, %v622
    %624 = vmatprep.mubr.bf16.mxu0 %v147
    %625 = vmatmul.mubr.bf16.gmra.mxu0 %v146
    %v626 = vpop.f32.mrf.mxu0
    %v627 = vadd.f32 %v235, %v626
    %v628 = vpop.f32.mrf.mxu0
    %v629 = vadd.f32 %v239, %v628
    %v630 = vpop.f32.mrf.mxu0
    %v631 = vadd.f32 %v235, %v630
    %v632 = vpop.f32.mrf.mxu0
    %v633 = vadd.f32 %v239, %v632
    %634 = vmatprep.mubr.bf16.mxu0 %v151
    %635 = vmatmul.mubr.bf16.gmra.mxu0 %v150
    %v636 = vpop.f32.mrf.mxu0
    %v637 = vadd.f32 %v235, %v636
    %v638 = vpop.f32.mrf.mxu0
    %v639 = vadd.f32 %v239, %v638
    %v640 = vpop.f32.mrf.mxu0
    %v641 = vadd.f32 %v235, %v640
    %v642 = vpop.f32.mrf.mxu0
    %v643 = vadd.f32 %v239, %v642
    %644 = vmatprep.mubr.bf16.mxu0 %v155
    %645 = vmatmul.mubr.bf16.gmra.mxu0 %v154
    %v646 = vpop.f32.mrf.mxu0
    %v647 = vadd.f32 %v235, %v646
    %v648 = vpop.f32.mrf.mxu0
    %v649 = vadd.f32 %v239, %v648
    %v650 = vpop.f32.mrf.mxu0
    %v651 = vadd.f32 %v235, %v650
    %v652 = vpop.f32.mrf.mxu0
    %v653 = vadd.f32 %v239, %v652
    %654 = vmatprep.mubr.bf16.mxu0 %v159
    %655 = vmatmul.mubr.bf16.gmra.mxu0 %v158
    %v656 = vpop.f32.mrf.mxu0
    %v657 = vadd.f32 %v235, %v656
    %v658 = vpop.f32.mrf.mxu0
    %v659 = vadd.f32 %v239, %v658
    %v660 = vpop.f32.mrf.mxu0
    %v661 = vadd.f32 %v235, %v660
    %v662 = vpop.f32.mrf.mxu0
    %v663 = vadd.f32 %v239, %v662
    %664 = vmatprep.mubr.bf16.mxu0 %v163
    %665 = vmatmul.mubr.bf16.gmra.mxu0 %v162
    %v666 = vpop.f32.mrf.mxu0
    %v667 = vadd.f32 %v235, %v666
    %v668 = vpop.f32.mrf.mxu0
    %v669 = vadd.f32 %v239, %v668
    %v670 = vpop.f32.mrf.mxu0
    %v671 = vadd.f32 %v235, %v670
    %v672 = vpop.f32.mrf.mxu0
    %v673 = vadd.f32 %v239, %v672
    %674 = vdwg.mxu0
    %675 = vmatprep.subr.bf16.mxu0 %v481
    %676 = vmatpush1.bf16.msra.mxu0 %v480
    %677 = vmatprep.subr.bf16.mxu0 %v479
    %678 = vmatpush1.bf16.msra.mxu0 %v478
    %679 = vmatprep.subr.bf16.mxu0 %v477
    %680 = vmatpush1.bf16.msra.mxu0 %v476
    %681 = vmatprep.subr.bf16.mxu0 %v475
    %682 = vmatpush1.bf16.msra.mxu0 %v474
    %683 = vmatprep.subr.bf16.mxu0 %v473
    %684 = vmatpush1.bf16.msra.mxu0 %v472
    %685 = vmatprep.subr.bf16.mxu0 %v471
    %686 = vmatpush1.bf16.msra.mxu0 %v470
    %687 = vmatprep.subr.bf16.mxu0 %v469
    %688 = vmatpush1.bf16.msra.mxu0 %v468
    %689 = vmatprep.subr.bf16.mxu0 %v467
    %690 = vmatpush1.bf16.msra.mxu0 %v466
    %691 = vmatprep.subr.bf16.mxu0 %v497
    %692 = vmatpush2.bf16.msra.mxu0 %v496
    %693 = vmatprep.subr.bf16.mxu0 %v495
    %694 = vmatpush2.bf16.msra.mxu0 %v494
    %695 = vmatprep.subr.bf16.mxu0 %v493
    %696 = vmatpush2.bf16.msra.mxu0 %v492
    %697 = vmatprep.subr.bf16.mxu0 %v491
    %698 = vmatpush2.bf16.msra.mxu0 %v490
    %699 = vmatprep.subr.bf16.mxu0 %v489
    %700 = vmatpush2.bf16.msra.mxu0 %v488
    %701 = vmatprep.subr.bf16.mxu0 %v487
    %702 = vmatpush2.bf16.msra.mxu0 %v486
    %703 = vmatprep.subr.bf16.mxu0 %v485
    %704 = vmatpush2.bf16.msra.mxu0 %v484
    %705 = vmatprep.subr.bf16.mxu0 %v483
    %706 = vmatpush2.bf16.msra.mxu0 %v482
    %707 = vmatprep.mubr.bf16.mxu0 %v137
    %708 = vmatmul.mubr.bf16.gmra.mxu0 %v136
    %v709 = vpop.f32.mrf.mxu0
    %v710 = vadd.f32 %v597, %v709
    %v711 = vpop.f32.mrf.mxu0
    %v712 = vadd.f32 %v599, %v711
    %v713 = vpop.f32.mrf.mxu0
    %v714 = vadd.f32 %v601, %v713
    %v715 = vpop.f32.mrf.mxu0
    %v716 = vadd.f32 %v603, %v715
    %717 = vmatprep.mubr.bf16.mxu0 %v141
    %718 = vmatmul.mubr.bf16.gmra.mxu0 %v140
    %v719 = vpop.f32.mrf.mxu0
    %v720 = vadd.f32 %v607, %v719
    %v721 = vpop.f32.mrf.mxu0
    %v722 = vadd.f32 %v609, %v721
    %v723 = vpop.f32.mrf.mxu0
    %v724 = vadd.f32 %v611, %v723
    %v725 = vpop.f32.mrf.mxu0
    %v726 = vadd.f32 %v613, %v725
    %727 = vmatprep.mubr.bf16.mxu0 %v145
    %728 = vmatmul.mubr.bf16.gmra.mxu0 %v144
    %v729 = vpop.f32.mrf.mxu0
    %v730 = vadd.f32 %v617, %v729
    %v731 = vpop.f32.mrf.mxu0
    %v732 = vadd.f32 %v619, %v731
    %v733 = vpop.f32.mrf.mxu0
    %v734 = vadd.f32 %v621, %v733
    %v735 = vpop.f32.mrf.mxu0
    %v736 = vadd.f32 %v623, %v735
    %737 = vmatprep.mubr.bf16.mxu0 %v149
    %738 = vmatmul.mubr.bf16.gmra.mxu0 %v148
    %v739 = vpop.f32.mrf.mxu0
    %v740 = vadd.f32 %v627, %v739
    %v741 = vpop.f32.mrf.mxu0
    %v742 = vadd.f32 %v629, %v741
    %v743 = vpop.f32.mrf.mxu0
    %v744 = vadd.f32 %v631, %v743
    %v745 = vpop.f32.mrf.mxu0
    %v746 = vadd.f32 %v633, %v745
    %747 = vmatprep.mubr.bf16.mxu0 %v153
    %748 = vmatmul.mubr.bf16.gmra.mxu0 %v152
    %v749 = vpop.f32.mrf.mxu0
    %v750 = vadd.f32 %v637, %v749
    %v751 = vpop.f32.mrf.mxu0
    %v752 = vadd.f32 %v639, %v751
    %v753 = vpop.f32.mrf.mxu0
    %v754 = vadd.f32 %v641, %v753
    %v755 = vpop.f32.mrf.mxu0
    %v756 = vadd.f32 %v643, %v755
    %757 = vmatprep.mubr.bf16.mxu0 %v157
    %758 = vmatmul.mubr.bf16.gmra.mxu0 %v156
    %v759 = vpop.f32.mrf.mxu0
    %v760 = vadd.f32 %v647, %v759
    %v761 = vpop.f32.mrf.mxu0
    %v762 = vadd.f32 %v649, %v761
    %v763 = vpop.f32.mrf.mxu0
    %v764 = vadd.f32 %v651, %v763
    %v765 = vpop.f32.mrf.mxu0
    %v766 = vadd.f32 %v653, %v765
    %767 = vmatprep.mubr.bf16.mxu0 %v161
    %768 = vmatmul.mubr.bf16.gmra.mxu0 %v160
    %v769 = vpop.f32.mrf.mxu0
    %v770 = vadd.f32 %v657, %v769
    %v771 = vpop.f32.mrf.mxu0
    %v772 = vadd.f32 %v659, %v771
    %v773 = vpop.f32.mrf.mxu0
    %v774 = vadd.f32 %v661, %v773
    %v775 = vpop.f32.mrf.mxu0
    %v776 = vadd.f32 %v663, %v775
    %777 = vmatprep.mubr.bf16.mxu0 %v165
    %778 = vmatmul.mubr.bf16.gmra.mxu0 %v164
    %v779 = vpop.f32.mrf.mxu0
    %v780 = vadd.f32 %v667, %v779
    %v781 = vpop.f32.mrf.mxu0
    %v782 = vadd.f32 %v669, %v781
    %v783 = vpop.f32.mrf.mxu0
    %v784 = vadd.f32 %v671, %v783
    %v785 = vpop.f32.mrf.mxu0
    %v786 = vadd.f32 %v673, %v785
    %787 = vdwg.mxu0
    %v788 = vmax.f32 %v710, 0.0
    %v789 = vmax.f32 %v712, 0.0
    %v790 = vmax.f32 %v714, 0.0
    %v791 = vmax.f32 %v716, 0.0
    %v792 = vmax.f32 %v720, 0.0
    %v793 = vmax.f32 %v722, 0.0
    %v794 = vmax.f32 %v724, 0.0
    %v795 = vmax.f32 %v726, 0.0
    %v796 = vmax.f32 %v730, 0.0
    %v797 = vmax.f32 %v732, 0.0
    %v798 = vmax.f32 %v734, 0.0
    %v799 = vmax.f32 %v736, 0.0
    %v800 = vmax.f32 %v740, 0.0
    %v801 = vmax.f32 %v742, 0.0
    %v802 = vmax.f32 %v744, 0.0
    %v803 = vmax.f32 %v746, 0.0
    %v804 = vmax.f32 %v750, 0.0
    %v805 = vmax.f32 %v752, 0.0
    %v806 = vmax.f32 %v754, 0.0
    %v807 = vmax.f32 %v756, 0.0
    %v808 = vmax.f32 %v760, 0.0
    %v809 = vmax.f32 %v762, 0.0
    %v810 = vmax.f32 %v764, 0.0
    %v811 = vmax.f32 %v766, 0.0
    %v812 = vmax.f32 %v770, 0.0
    %v813 = vmax.f32 %v772, 0.0
    %v814 = vmax.f32 %v774, 0.0
    %v815 = vmax.f32 %v776, 0.0
    %v816 = vmax.f32 %v780, 0.0
    %v817 = vmax.f32 %v782, 0.0
    %v818 = vmax.f32 %v784, 0.0
    %v819 = vmax.f32 %v786, 0.0
    %v820 = vpack.c.bf16 %v790, %v788
    %v821 = vpack.c.bf16 %v791, %v789
    %v822 = vpack.c.bf16 %v794, %v792
    %v823 = vpack.c.bf16 %v795, %v793
    %v824 = vpack.c.bf16 %v798, %v796
    %v825 = vpack.c.bf16 %v799, %v797
    %v826 = vpack.c.bf16 %v802, %v800
    %v827 = vpack.c.bf16 %v803, %v801
    %v828 = vpack.c.bf16 %v806, %v804
    %v829 = vpack.c.bf16 %v807, %v805
    %v830 = vpack.c.bf16 %v810, %v808
    %v831 = vpack.c.bf16 %v811, %v809
    %v832 = vpack.c.bf16 %v814, %v812
    %v833 = vpack.c.bf16 %v815, %v813
    %v834 = vpack.c.bf16 %v818, %v816
    %v835 = vpack.c.bf16 %v819, %v817
    %v836 = vld [vmem:[#allocation8] sm:$0xf]
    %v837 = vld [vmem:[#allocation8 + $0x4] sm:$0xf]
    %v838 = vld [vmem:[#allocation8 + $0x8] sm:$0xf]
    %v839 = vld [vmem:[#allocation8 + $0xc] sm:$0xf]
    %v840 = vld [vmem:[#allocation8 + $0x10] sm:$0xf]
    %v841 = vld [vmem:[#allocation8 + $0x14] sm:$0xf]
    %v842 = vld [vmem:[#allocation8 + $0x18] sm:$0xf]
    %v843 = vld [vmem:[#allocation8 + $0x1c] sm:$0xf]
    %v844 = vld [vmem:[#allocation8 + $0x20] sm:$0xf]
    %v845 = vld [vmem:[#allocation8 + $0x24] sm:$0xf]
    %v846 = vld [vmem:[#allocation8 + $0x28] sm:$0xf]
    %v847 = vld [vmem:[#allocation8 + $0x2c] sm:$0xf]
    %v848 = vld [vmem:[#allocation8 + $0x30] sm:$0xf]
    %v849 = vld [vmem:[#allocation8 + $0x34] sm:$0xf]
    %v850 = vld [vmem:[#allocation8 + $0x38] sm:$0xf]
    %v851 = vld [vmem:[#allocation8 + $0x3c] sm:$0xf]
    %v852 = vld [vmem:[#allocation8 + $0x40] sm:$0xf]
    %v853 = vld [vmem:[#allocation8 + $0x44] sm:$0xf]
    %v854 = vld [vmem:[#allocation8 + $0x48] sm:$0xf]
    %v855 = vld [vmem:[#allocation8 + $0x4c] sm:$0xf]
    %v856 = vld [vmem:[#allocation8 + $0x50] sm:$0xf]
    %v857 = vld [vmem:[#allocation8 + $0x54] sm:$0xf]
    %v858 = vld [vmem:[#allocation8 + $0x58] sm:$0xf]
    %v859 = vld [vmem:[#allocation8 + $0x5c] sm:$0xf]
    %v860 = vld [vmem:[#allocation8 + $0x60] sm:$0xf]
    %v861 = vld [vmem:[#allocation8 + $0x64] sm:$0xf]
    %v862 = vld [vmem:[#allocation8 + $0x68] sm:$0xf]
    %v863 = vld [vmem:[#allocation8 + $0x6c] sm:$0xf]
    %v864 = vld [vmem:[#allocation8 + $0x70] sm:$0xf]
    %v865 = vld [vmem:[#allocation8 + $0x74] sm:$0xf]
    %v866 = vld [vmem:[#allocation8 + $0x78] sm:$0xf]
    %v867 = vld [vmem:[#allocation8 + $0x7c] sm:$0xf]
    %v868 = vld [vmem:[%s4] sm:$0x1]
    %v870 = vlaneseq
    %v871 = vshrl.u32 %v870, 7
    %v872 = vsub.s32 0, %v871
    %v873 = vrot.slane %v868, %v872
    %v907 = vunpack.c.l.b16 %v836
    %v908 = vunpack.c.l.b16 %v837
    %v909 = vunpack.c.l.b16 %v838
    %v910 = vunpack.c.l.b16 %v839
    %v911 = vunpack.c.l.b16 %v840
    %v912 = vunpack.c.l.b16 %v841
    %v913 = vunpack.c.l.b16 %v842
    %v914 = vunpack.c.l.b16 %v843
    %v915 = vunpack.c.l.b16 %v844
    %v916 = vunpack.c.l.b16 %v845
    %v917 = vunpack.c.l.b16 %v846
    %v918 = vunpack.c.l.b16 %v847
    %v919 = vunpack.c.l.b16 %v848
    %v920 = vunpack.c.l.b16 %v849
    %v921 = vunpack.c.l.b16 %v850
    %v922 = vunpack.c.l.b16 %v851
    %v923 = vunpack.c.l.b16 %v852
    %v924 = vunpack.c.l.b16 %v853
    %v925 = vunpack.c.l.b16 %v854
    %v926 = vunpack.c.l.b16 %v855
    %v927 = vunpack.c.l.b16 %v856
    %v928 = vunpack.c.l.b16 %v857
    %v929 = vunpack.c.l.b16 %v858
    %v930 = vunpack.c.l.b16 %v859
    %v931 = vunpack.c.l.b16 %v860
    %v932 = vunpack.c.l.b16 %v861
    %v933 = vunpack.c.l.b16 %v862
    %v934 = vunpack.c.l.b16 %v863
    %v935 = vunpack.c.l.b16 %v864
    %v936 = vunpack.c.l.b16 %v865
    %v937 = vunpack.c.l.b16 %v866
    %v938 = vunpack.c.l.b16 %v867
    %v939 = vpack.c.b16 %v908, %v907
    %v940 = vpack.c.b16 %v910, %v909
    %v941 = vpack.c.b16 %v912, %v911
    %v942 = vpack.c.b16 %v914, %v913
    %v943 = vpack.c.b16 %v916, %v915
    %v944 = vpack.c.b16 %v918, %v917
    %v945 = vpack.c.b16 %v920, %v919
    %v946 = vpack.c.b16 %v922, %v921
    %v947 = vpack.c.b16 %v924, %v923
    %v948 = vpack.c.b16 %v926, %v925
    %v949 = vpack.c.b16 %v928, %v927
    %v950 = vpack.c.b16 %v930, %v929
    %v951 = vpack.c.b16 %v932, %v931
    %v952 = vpack.c.b16 %v934, %v933
    %v953 = vpack.c.b16 %v936, %v935
    %v954 = vpack.c.b16 %v938, %v937
    %971 = vmatprep.subr.bf16.mxu0 0
    %972 = vmatpush1.bf16.msra.mxu0 %v946
    %973 = vmatprep.subr.bf16.mxu0 0
    %974 = vmatpush1.bf16.msra.mxu0 %v945
    %975 = vmatprep.subr.bf16.mxu0 0
    %976 = vmatpush1.bf16.msra.mxu0 %v944
    %977 = vmatprep.subr.bf16.mxu0 0
    %978 = vmatpush1.bf16.msra.mxu0 %v943
    %979 = vmatprep.subr.bf16.mxu0 0
    %980 = vmatpush1.bf16.msra.mxu0 %v942
    %981 = vmatprep.subr.bf16.mxu0 0
    %982 = vmatpush1.bf16.msra.mxu0 %v941
    %983 = vmatprep.subr.bf16.mxu0 0
    %984 = vmatpush1.bf16.msra.mxu0 %v940
    %985 = vmatprep.subr.bf16.mxu0 0
    %986 = vmatpush1.bf16.msra.mxu0 %v939
    %987 = vmatprep.subr.bf16.mxu0 0
    %988 = vmatpush2.bf16.msra.mxu0 %v954
    %989 = vmatprep.subr.bf16.mxu0 0
    %990 = vmatpush2.bf16.msra.mxu0 %v953
    %991 = vmatprep.subr.bf16.mxu0 0
    %992 = vmatpush2.bf16.msra.mxu0 %v952
    %993 = vmatprep.subr.bf16.mxu0 0
    %994 = vmatpush2.bf16.msra.mxu0 %v951
    %995 = vmatprep.subr.bf16.mxu0 0
    %996 = vmatpush2.bf16.msra.mxu0 %v950
    %997 = vmatprep.subr.bf16.mxu0 0
    %998 = vmatpush2.bf16.msra.mxu0 %v949
    %999 = vmatprep.subr.bf16.mxu0 0
    %1000 = vmatpush2.bf16.msra.mxu0 %v948
    %1001 = vmatprep.subr.bf16.mxu0 0
    %1002 = vmatpush2.bf16.msra.mxu0 %v947
    %1003 = vmatprep.mubr.bf16.mxu0 %v821
    %1004 = vmatmul.mubr.bf16.gmra.mxu0 %v820
    %v1005 = vpop.f32.mrf.mxu0
    %v1006 = vadd.f32 %v873, %v1005
    %v1007 = vpop.f32.mrf.mxu0
    %v1008 = vpop.f32.mrf.mxu0
    %v1009 = vadd.f32 %v873, %v1008
    %v1010 = vpop.f32.mrf.mxu0
    %1011 = vmatprep.mubr.bf16.mxu0 %v823
    %1012 = vmatmul.mubr.bf16.gmra.mxu0 %v822
    %v1013 = vpop.f32.mrf.mxu0
    %v1014 = vadd.f32 %v873, %v1013
    %v1015 = vpop.f32.mrf.mxu0
    %v1016 = vpop.f32.mrf.mxu0
    %v1017 = vadd.f32 %v873, %v1016
    %v1018 = vpop.f32.mrf.mxu0
    %1019 = vmatprep.mubr.bf16.mxu0 %v825
    %1020 = vmatmul.mubr.bf16.gmra.mxu0 %v824
    %v1021 = vpop.f32.mrf.mxu0
    %v1022 = vadd.f32 %v873, %v1021
    %v1023 = vpop.f32.mrf.mxu0
    %v1024 = vpop.f32.mrf.mxu0
    %v1025 = vadd.f32 %v873, %v1024
    %v1026 = vpop.f32.mrf.mxu0
    %1027 = vmatprep.mubr.bf16.mxu0 %v827
    %1028 = vmatmul.mubr.bf16.gmra.mxu0 %v826
    %v1029 = vpop.f32.mrf.mxu0
    %v1030 = vadd.f32 %v873, %v1029
    %v1031 = vpop.f32.mrf.mxu0
    %v1032 = vpop.f32.mrf.mxu0
    %v1033 = vadd.f32 %v873, %v1032
    %v1034 = vpop.f32.mrf.mxu0
    %1035 = vmatprep.mubr.bf16.mxu0 %v829
    %1036 = vmatmul.mubr.bf16.gmra.mxu0 %v828
    %v1037 = vpop.f32.mrf.mxu0
    %v1038 = vadd.f32 %v873, %v1037
    %v1039 = vpop.f32.mrf.mxu0
    %v1040 = vpop.f32.mrf.mxu0
    %v1041 = vadd.f32 %v873, %v1040
    %v1042 = vpop.f32.mrf.mxu0
    %1043 = vmatprep.mubr.bf16.mxu0 %v831
    %1044 = vmatmul.mubr.bf16.gmra.mxu0 %v830
    %v1045 = vpop.f32.mrf.mxu0
    %v1046 = vadd.f32 %v873, %v1045
    %v1047 = vpop.f32.mrf.mxu0
    %v1048 = vpop.f32.mrf.mxu0
    %v1049 = vadd.f32 %v873, %v1048
    %v1050 = vpop.f32.mrf.mxu0
    %1051 = vmatprep.mubr.bf16.mxu0 %v833
    %1052 = vmatmul.mubr.bf16.gmra.mxu0 %v832
    %v1053 = vpop.f32.mrf.mxu0
    %v1054 = vadd.f32 %v873, %v1053
    %v1055 = vpop.f32.mrf.mxu0
    %v1056 = vpop.f32.mrf.mxu0
    %v1057 = vadd.f32 %v873, %v1056
    %v1058 = vpop.f32.mrf.mxu0
    %1059 = vmatprep.mubr.bf16.mxu0 %v835
    %1060 = vmatmul.mubr.bf16.gmra.mxu0 %v834
    %v1061 = vpop.f32.mrf.mxu0
    %v1062 = vadd.f32 %v873, %v1061
    %v1063 = vpop.f32.mrf.mxu0
    %v1064 = vpop.f32.mrf.mxu0
    %v1065 = vadd.f32 %v873, %v1064
    %v1066 = vpop.f32.mrf.mxu0
    %1067 = vdwg.mxu0
    %v1068 = vmax.f32 %v1006, 0.0
    %v1069 = vmax.f32 %v1009, 0.0
    %v1070 = vmax.f32 %v1014, 0.0
    %v1071 = vmax.f32 %v1017, 0.0
    %v1072 = vmax.f32 %v1022, 0.0
    %v1073 = vmax.f32 %v1025, 0.0
    %v1074 = vmax.f32 %v1030, 0.0
    %v1075 = vmax.f32 %v1033, 0.0
    %v1076 = vmax.f32 %v1038, 0.0
    %v1077 = vmax.f32 %v1041, 0.0
    %v1078 = vmax.f32 %v1046, 0.0
    %v1079 = vmax.f32 %v1049, 0.0
    %v1080 = vmax.f32 %v1054, 0.0
    %v1081 = vmax.f32 %v1057, 0.0
    %v1082 = vmax.f32 %v1062, 0.0
    %v1083 = vmax.f32 %v1065, 0.0
    %v1084 = vld [vmem:[%s5] sm:$0x1]
    %v1086 = vlaneseq
    %v1087 = vshrl.u32 %v1086, 7
    %v1088 = vsub.s32 0, %v1087
    %v1089 = vrot.slane %v1084, %v1088
    %v1091 = vmul.f32 %v1068, %v1089
    %v1092 = vmul.f32 %v1069, %v1089
    %v1093 = vmul.f32 %v1070, %v1089
    %v1094 = vmul.f32 %v1071, %v1089
    %v1095 = vmul.f32 %v1072, %v1089
    %v1096 = vmul.f32 %v1073, %v1089
    %v1097 = vmul.f32 %v1074, %v1089
    %v1098 = vmul.f32 %v1075, %v1089
    %v1099 = vmul.f32 %v1076, %v1089
    %v1100 = vmul.f32 %v1077, %v1089
    %v1101 = vmul.f32 %v1078, %v1089
    %v1102 = vmul.f32 %v1079, %v1089
    %v1103 = vmul.f32 %v1080, %v1089
    %v1104 = vmul.f32 %v1081, %v1089
    %v1105 = vmul.f32 %v1082, %v1089
    %v1106 = vmul.f32 %v1083, %v1089
    %1107 = vadd.xlane.f32.xlu0 %v1091
    %v1108 = vpop.xlane.xlu0 %1107
    %1109 = vadd.xlane.f32.xlu0 %v1092
    %v1110 = vpop.xlane.xlu0 %1109
    %1111 = vadd.xlane.f32.xlu0 %v1093
    %v1112 = vpop.xlane.xlu0 %1111
    %1113 = vadd.xlane.f32.xlu0 %v1094
    %v1114 = vpop.xlane.xlu0 %1113
    %1115 = vadd.xlane.f32.xlu0 %v1095
    %v1116 = vpop.xlane.xlu0 %1115
    %1117 = vadd.xlane.f32.xlu0 %v1096
    %v1118 = vpop.xlane.xlu0 %1117
    %1119 = vadd.xlane.f32.xlu0 %v1097
    %v1120 = vpop.xlane.xlu0 %1119
    %1121 = vadd.xlane.f32.xlu0 %v1098
    %v1122 = vpop.xlane.xlu0 %1121
    %1123 = vadd.xlane.f32.xlu0 %v1099
    %v1124 = vpop.xlane.xlu0 %1123
    %1125 = vadd.xlane.f32.xlu0 %v1100
    %v1126 = vpop.xlane.xlu0 %1125
    %1127 = vadd.xlane.f32.xlu0 %v1101
    %v1128 = vpop.xlane.xlu0 %1127
    %1129 = vadd.xlane.f32.xlu0 %v1102
    %v1130 = vpop.xlane.xlu0 %1129
    %1131 = vadd.xlane.f32.xlu0 %v1103
    %v1132 = vpop.xlane.xlu0 %1131
    %1133 = vadd.xlane.f32.xlu0 %v1104
    %v1134 = vpop.xlane.xlu0 %1133
    %1135 = vadd.xlane.f32.xlu0 %v1105
    %v1136 = vpop.xlane.xlu0 %1135
    %1137 = vadd.xlane.f32.xlu0 %v1106
    %v1138 = vpop.xlane.xlu0 %1137
    %s1139 = sld [smem:[#allocation2]]
    %v1140 = vstv %s1139
    %v1141 = vadd.f32 %v1108, %v1140
    %v1142 = vadd.f32 %v1110, %v1140
    %v1143 = vadd.f32 %v1112, %v1140
    %v1144 = vadd.f32 %v1114, %v1140
    %v1145 = vadd.f32 %v1116, %v1140
    %v1146 = vadd.f32 %v1118, %v1140
    %v1147 = vadd.f32 %v1120, %v1140
    %v1148 = vadd.f32 %v1122, %v1140
    %v1149 = vadd.f32 %v1124, %v1140
    %v1150 = vadd.f32 %v1126, %v1140
    %v1151 = vadd.f32 %v1128, %v1140
    %v1152 = vadd.f32 %v1130, %v1140
    %v1153 = vadd.f32 %v1132, %v1140
    %v1154 = vadd.f32 %v1134, %v1140
    %v1155 = vadd.f32 %v1136, %v1140
    %v1156 = vadd.f32 %v1138, %v1140
    %v1157 = vxor.u32 %v1141, 2147483648
    %v1158 = vxor.u32 %v1142, 2147483648
    %v1159 = vxor.u32 %v1143, 2147483648
    %v1160 = vxor.u32 %v1144, 2147483648
    %v1161 = vxor.u32 %v1145, 2147483648
    %v1162 = vxor.u32 %v1146, 2147483648
    %v1163 = vxor.u32 %v1147, 2147483648
    %v1164 = vxor.u32 %v1148, 2147483648
    %v1165 = vxor.u32 %v1149, 2147483648
    %v1166 = vxor.u32 %v1150, 2147483648
    %v1167 = vxor.u32 %v1151, 2147483648
    %v1168 = vxor.u32 %v1152, 2147483648
    %v1169 = vxor.u32 %v1153, 2147483648
    %v1170 = vxor.u32 %v1154, 2147483648
    %v1171 = vxor.u32 %v1155, 2147483648
    %v1172 = vxor.u32 %v1156, 2147483648
    %v1173 = vmul.f32 %v1157, 1.442695
    %v1174 = vpow.pop %v1173
    %v1175 = vmul.f32 %v1158, 1.442695
    %v1176 = vpow.pop %v1175
    %v1177 = vmul.f32 %v1159, 1.442695
    %v1178 = vpow.pop %v1177
    %v1179 = vmul.f32 %v1160, 1.442695
    %v1180 = vpow.pop %v1179
    %v1181 = vmul.f32 %v1161, 1.442695
    %v1182 = vpow.pop %v1181
    %v1183 = vmul.f32 %v1162, 1.442695
    %v1184 = vpow.pop %v1183
    %v1185 = vmul.f32 %v1163, 1.442695
    %v1186 = vpow.pop %v1185
    %v1187 = vmul.f32 %v1164, 1.442695
    %v1188 = vpow.pop %v1187
    %v1189 = vmul.f32 %v1165, 1.442695
    %v1190 = vpow.pop %v1189
    %v1191 = vmul.f32 %v1166, 1.442695
    %v1192 = vpow.pop %v1191
    %v1193 = vmul.f32 %v1167, 1.442695
    %v1194 = vpow.pop %v1193
    %v1195 = vmul.f32 %v1168, 1.442695
    %v1196 = vpow.pop %v1195
    %v1197 = vmul.f32 %v1169, 1.442695
    %v1198 = vpow.pop %v1197
    %v1199 = vmul.f32 %v1170, 1.442695
    %v1200 = vpow.pop %v1199
    %v1201 = vmul.f32 %v1171, 1.442695
    %v1202 = vpow.pop %v1201
    %v1203 = vmul.f32 %v1172, 1.442695
    %v1204 = vpow.pop %v1203
    %v1205 = vadd.f32 %v1174, 1.0
    %v1206 = vadd.f32 %v1176, 1.0
    %v1207 = vadd.f32 %v1178, 1.0
    %v1208 = vadd.f32 %v1180, 1.0
    %v1209 = vadd.f32 %v1182, 1.0
    %v1210 = vadd.f32 %v1184, 1.0
    %v1211 = vadd.f32 %v1186, 1.0
    %v1212 = vadd.f32 %v1188, 1.0
    %v1213 = vadd.f32 %v1190, 1.0
    %v1214 = vadd.f32 %v1192, 1.0
    %v1215 = vadd.f32 %v1194, 1.0
    %v1216 = vadd.f32 %v1196, 1.0
    %v1217 = vadd.f32 %v1198, 1.0
    %v1218 = vadd.f32 %v1200, 1.0
    %v1219 = vadd.f32 %v1202, 1.0
    %v1220 = vadd.f32 %v1204, 1.0
    %v1221 = vrcp.pop %v1205
    %v1222 = vmul.f32 1.0, %v1221
    %v1223 = vrcp.pop %v1206
    %v1224 = vmul.f32 1.0, %v1223
    %v1225 = vrcp.pop %v1207
    %v1226 = vmul.f32 1.0, %v1225
    %v1227 = vrcp.pop %v1208
    %v1228 = vmul.f32 1.0, %v1227
    %v1229 = vrcp.pop %v1209
    %v1230 = vmul.f32 1.0, %v1229
    %v1231 = vrcp.pop %v1210
    %v1232 = vmul.f32 1.0, %v1231
    %v1233 = vrcp.pop %v1211
    %v1234 = vmul.f32 1.0, %v1233
    %v1235 = vrcp.pop %v1212
    %v1236 = vmul.f32 1.0, %v1235
    %v1237 = vrcp.pop %v1213
    %v1238 = vmul.f32 1.0, %v1237
    %v1239 = vrcp.pop %v1214
    %v1240 = vmul.f32 1.0, %v1239
    %v1241 = vrcp.pop %v1215
    %v1242 = vmul.f32 1.0, %v1241
    %v1243 = vrcp.pop %v1216
    %v1244 = vmul.f32 1.0, %v1243
    %v1245 = vrcp.pop %v1217
    %v1246 = vmul.f32 1.0, %v1245
    %v1247 = vrcp.pop %v1218
    %v1248 = vmul.f32 1.0, %v1247
    %v1249 = vrcp.pop %v1219
    %v1250 = vmul.f32 1.0, %v1249
    %v1251 = vrcp.pop %v1220
    %v1252 = vmul.f32 1.0, %v1251
    %v1269 = vlaneseq
    %v1270 = vand.u32 %v1269, 127
    %v1271 = vlaneseq
    %v1272 = vshrl.u32 %v1271, 7
    %v1273 = vsub.s32 %v1270, %v1272
    %v1274 = vrot.slane %v1222, %v1273
    %v1275 = vadd.s32 %v1270, 4294967288
    %v1276 = vlaneseq
    %v1277 = vshrl.u32 %v1276, 7
    %v1278 = vsub.s32 %v1275, %v1277
    %v1279 = vrot.slane %v1224, %v1278
    %vm1280 = vcmask 130112
    %v1281 = vsel %vm1280, %v1279, %v1274
    %v1282 = vadd.s32 %v1270, 4294967280
    %v1283 = vlaneseq
    %v1284 = vshrl.u32 %v1283, 7
    %v1285 = vsub.s32 %v1282, %v1284
    %v1286 = vrot.slane %v1226, %v1285
    %vm1287 = vcmask 195712
    %v1288 = vsel %vm1287, %v1286, %v1281
    %v1289 = vadd.s32 %v1270, 4294967272
    %v1290 = vlaneseq
    %v1291 = vshrl.u32 %v1290, 7
    %v1292 = vsub.s32 %v1289, %v1291
    %v1293 = vrot.slane %v1228, %v1292
    %vm1294 = vcmask 261312
    %v1295 = vsel %vm1294, %v1293, %v1288
    %v1296 = vadd.s32 %v1270, 4294967264
    %v1297 = vlaneseq
    %v1298 = vshrl.u32 %v1297, 7
    %v1299 = vsub.s32 %v1296, %v1298
    %v1300 = vrot.slane %v1230, %v1299
    %vm1301 = vcmask 326912
    %v1302 = vsel %vm1301, %v1300, %v1295
    %v1303 = vadd.s32 %v1270, 4294967256
    %v1304 = vlaneseq
    %v1305 = vshrl.u32 %v1304, 7
    %v1306 = vsub.s32 %v1303, %v1305
    %v1307 = vrot.slane %v1232, %v1306
    %vm1308 = vcmask 392512
    %v1309 = vsel %vm1308, %v1307, %v1302
    %v1310 = vadd.s32 %v1270, 4294967248
    %v1311 = vlaneseq
    %v1312 = vshrl.u32 %v1311, 7
    %v1313 = vsub.s32 %v1310, %v1312
    %v1314 = vrot.slane %v1234, %v1313
    %vm1315 = vcmask 458112
    %v1316 = vsel %vm1315, %v1314, %v1309
    %v1317 = vadd.s32 %v1270, 4294967240
    %v1318 = vlaneseq
    %v1319 = vshrl.u32 %v1318, 7
    %v1320 = vsub.s32 %v1317, %v1319
    %v1321 = vrot.slane %v1236, %v1320
    %vm1322 = vcmask 523712
    %v1323 = vsel %vm1322, %v1321, %v1316
    %v1324 = vadd.s32 %v1270, 4294967232
    %v1325 = vlaneseq
    %v1326 = vshrl.u32 %v1325, 7
    %v1327 = vsub.s32 %v1324, %v1326
    %v1328 = vrot.slane %v1238, %v1327
    %vm1329 = vcmask 589312
    %v1330 = vsel %vm1329, %v1328, %v1323
    %v1331 = vadd.s32 %v1270, 4294967224
    %v1332 = vlaneseq
    %v1333 = vshrl.u32 %v1332, 7
    %v1334 = vsub.s32 %v1331, %v1333
    %v1335 = vrot.slane %v1240, %v1334
    %vm1336 = vcmask 654912
    %v1337 = vsel %vm1336, %v1335, %v1330
    %v1338 = vadd.s32 %v1270, 4294967216
    %v1339 = vlaneseq
    %v1340 = vshrl.u32 %v1339, 7
    %v1341 = vsub.s32 %v1338, %v1340
    %v1342 = vrot.slane %v1242, %v1341
    %vm1343 = vcmask 720512
    %v1344 = vsel %vm1343, %v1342, %v1337
    %v1345 = vadd.s32 %v1270, 4294967208
    %v1346 = vlaneseq
    %v1347 = vshrl.u32 %v1346, 7
    %v1348 = vsub.s32 %v1345, %v1347
    %v1349 = vrot.slane %v1244, %v1348
    %vm1350 = vcmask 786112
    %v1351 = vsel %vm1350, %v1349, %v1344
    %v1352 = vadd.s32 %v1270, 4294967200
    %v1353 = vlaneseq
    %v1354 = vshrl.u32 %v1353, 7
    %v1355 = vsub.s32 %v1352, %v1354
    %v1356 = vrot.slane %v1246, %v1355
    %vm1357 = vcmask 851712
    %v1358 = vsel %vm1357, %v1356, %v1351
    %v1359 = vadd.s32 %v1270, 4294967192
    %v1360 = vlaneseq
    %v1361 = vshrl.u32 %v1360, 7
    %v1362 = vsub.s32 %v1359, %v1361
    %v1363 = vrot.slane %v1248, %v1362
    %vm1364 = vcmask 917312
    %v1365 = vsel %vm1364, %v1363, %v1358
    %v1366 = vadd.s32 %v1270, 4294967184
    %v1367 = vlaneseq
    %v1368 = vshrl.u32 %v1367, 7
    %v1369 = vsub.s32 %v1366, %v1368
    %v1370 = vrot.slane %v1250, %v1369
    %vm1371 = vcmask 982912
    %v1372 = vsel %vm1371, %v1370, %v1365
    %v1373 = vadd.s32 %v1270, 4294967176
    %v1374 = vlaneseq
    %v1375 = vshrl.u32 %v1374, 7
    %v1376 = vsub.s32 %v1373, %v1375
    %v1377 = vrot.slane %v1252, %v1376
    %vm1378 = vcmask 1048512
    %v1379 = vsel %vm1378, %v1377, %v1372
    %1381 = vst [vmem:[#allocation9] sm:$0x1] %v1379
    // Predicated region
    $region42: #{tpu_custom_call.1} parent=1 // pred_check
      _
    $region43: #{tpu_custom_call.1} parent=1 // pred_check_branch
      %1383 = sbr.rel (0) target = $region45
    $region44: #{tpu_custom_call.1} parent=1 // pred_region
      %s1385 = ssub.s32 16, 16
      %1386 = vsyncadd [#allocation5], %s1385
      %s1388 = sshll.u32 [#allocation9], 4
      %s1389 = int_to_ptr.vmem [resolvable:$true] %s1388
      %1391 = dma.vmem_to_hbm [thread:$0]  %s1389, 16, %s7, [#allocation5]
    $region45: #{tpu_custom_call.1} parent=1 // pred_fallthru
      _
    // Predicated region
    $region46: #{tpu_custom_call.1} parent=1 // pred_check
      _
    $region47: #{tpu_custom_call.1} parent=1 // pred_check_branch
      %1393 = sbr.rel (0) target = $region49
    $region48: #{tpu_custom_call.1} parent=1 // pred_region
      %1394 = dma.done [#allocation5], 16
    $region49: #{tpu_custom_call.1} parent=1 // pred_fallthru
      _
    %1395 = vsyncpa [#allocation4], 1
    %1396 = vsyncpa [#allocation7], 1
    %1397 = vsyncpa [#allocation5], 1

</llo_original>
